<compile_context>
chip_gen: v7x
topology: tpu7x:2x2x1
jax: 0.10.0
libtpu: 0.0.40
codegen_flags: <defaults>
</compile_context>

<pallas_src>
import functools

import jax
import jax.numpy as jnp
from jax.experimental import pallas as pl
from jax.experimental.pallas import tpu as pltpu

GAMMA = 12.0


# --------------------------------------------------------------------------
# Fused kernel: projection + TransE scores + weighted sigmoid-loss partials
# --------------------------------------------------------------------------
def _stage_loss_kernel(x_ref, w3_ref, rmat_ref, coef_ref, out_ref, *, gamma):
    """One batch block.

    x_ref    : (TB*C, 3D) bf16   rows = [head_b | rel_b | tail_bc]
    w3_ref   : (3D, D)    bf16   [[W_e]; [W_r]; [-W_e]]
    rmat_ref : (8, D)     bf16   row0 = ones (full L1), row1 = prune mask, rows 2..7 = 0
    coef_ref : (2, TB*C)  f32    row0 = positive-row weights, row1 = negative-row weights
    out_ref  : (1, 8)     f32    accumulated [sum_w, pos_f, neg_f, pos_t, neg_t, 0, 0, 0]
    """
    step = pl.program_id(0)

    # ---- single bf16 MXU matmul: (h + r - t) in projected space ------------------
    diff = jnp.dot(x_ref[...], w3_ref[...],
                   preferred_element_type=jnp.float32)                 # (N, D) f32
    adiff = jnp.abs(diff).astype(jnp.bfloat16)                         # (N, D) bf16

    # ---- both L1 sums (full + pruned) via one lane-dense bf16 MXU dot -------------
    # Output orientation (rows, N): lane dim = candidates, so the whole epilogue
    # stays lane-packed.
    sums = jnp.einsum('rd,nd->rn', rmat_ref[...], adiff,
                      preferred_element_type=jnp.float32)[0:2, :]      # (2, N)
    score = gamma - sums               # row0 = full-dim score, row1 = pruned ("tmp")

    # ---- -log(sigmoid(+-x)) sharing one exp + one log over the packed array -------
    t = jnp.exp(-jnp.abs(score))
    lg = jnp.log(1.0 + t)
    pos_nl = lg - jnp.minimum(score, 0.0)     # -log sigmoid(score)
    neg_nl = lg + jnp.maximum(score, 0.0)     # -log sigmoid(-score)

    cp = coef_ref[0:1, :]                     # (1, N) positive-row weights
    cn = coef_ref[1:2, :]                     # (1, N) negative-row weights
    s_pos = jnp.sum(cp * pos_nl, axis=1, keepdims=True)   # (2,1): [pos_full, pos_tmp]
    s_neg = jnp.sum(cn * neg_nl, axis=1, keepdims=True)   # (2,1): [neg_full, neg_tmp]
    s_w = jnp.sum(cp, axis=1, keepdims=True)               # (1,1): sum of weights

    lane = jax.lax.broadcasted_iota(jnp.int32, (1, 8), 1)
    packed = (jnp.where(lane == 0, s_w, 0.0)
              + jnp.where(lane == 1, s_pos[0:1, :], 0.0)
              + jnp.where(lane == 2, s_neg[0:1, :], 0.0)
              + jnp.where(lane == 3, s_pos[1:2, :], 0.0)
              + jnp.where(lane == 4, s_neg[1:2, :], 0.0))

    @pl.when(step == 0)
    def _init():
        out_ref[...] = jnp.zeros_like(out_ref)

    out_ref[...] += packed          # output block is resident across the batch axis


def _pick_batch_block(B, C, requested, row_bytes, budget=8 << 20):
    """Largest batch tile tb dividing B such that the bf16 x-tile fits `budget`
    and (tb == B or tb*C % 128 == 0) -> satisfies the (8,128) tiling rule."""
    def ok(tb):
        return B % tb == 0 and (tb == B or (tb * C) % 128 == 0)
    if requested is not None and ok(requested):
        cands = [requested]
    else:
        cands = [tb for tb in range(B, 0, -1) if ok(tb)]
    for tb in cands:
        if tb * C * row_bytes <= budget:
            return tb
    return cands[-1]


def fused_stage_loss(head, rel, tail2d, w_ent, w_rel, subsampling_weight, *,
                     prune_dim, num_cand, gamma=GAMMA, batch_block=None):
    """Returns (pos_loss, neg_loss, loss, tmp_pos_loss, tmp_neg_loss, tmp_loss)."""
    B, D = head.shape
    C = num_cand
    assert tail2d.shape == (B * C, D)
    bf16 = jnp.bfloat16

    # One lane-dense bf16 operand: [head | rel] replicated over candidates + tails.
    x = jnp.concatenate([jnp.repeat(head, C, axis=0),
                         jnp.repeat(rel, C, axis=0),
                         tail2d], axis=1).astype(bf16)                  # (B*C, 3D)
    w3 = jnp.concatenate([w_ent, w_rel, -w_ent], axis=0).astype(bf16)   # (3D, D)

    # (8, D): row0 = ones (full-dim L1), row1 = pruned-dim mask, rows 2..7 = 0.
    rmat = jnp.zeros((8, D), jnp.float32)
    rmat = rmat.at[0].set(1.0)
    rmat = rmat.at[1].set((jnp.arange(D) < prune_dim).astype(jnp.float32))
    rmat = rmat.astype(bf16)

    # Lane-major loss coefficients: positive rows carry w[b]; negatives w[b]/(C-1).
    w = subsampling_weight.astype(jnp.float32).reshape(B)
    w_rep = jnp.repeat(w, C)
    is_pos = (jnp.arange(B * C) % C) == 0
    coef = jnp.stack([jnp.where(is_pos, w_rep, 0.0),
                      jnp.where(is_pos, 0.0, w_rep / float(max(C - 1, 1)))],
                     axis=0)                                            # (2, B*C)

    tb = _pick_batch_block(B, C, batch_block, row_bytes=3 * D * 2)
    grid = (B // tb,)

    kernel = functools.partial(_stage_loss_kernel, gamma=gamma)
    out = pl.pallas_call(
        kernel,
        grid=grid,
        in_specs=[
            pl.BlockSpec((tb * C, 3 * D), lambda b: (b, 0)),   # fused operand
            pl.BlockSpec((3 * D, D), lambda b: (0, 0)),        # [W_e; W_r; -W_e]
            pl.BlockSpec((8, D), lambda b: (0, 0)),            # L1 reduce rows
            pl.BlockSpec((2, tb * C), lambda b: (0, b)),       # loss coefficients
        ],
        out_specs=pl.BlockSpec((1, 8), lambda b: (0, 0)),
        out_shape=jax.ShapeDtypeStruct((1, 8), jnp.float32),
        compiler_params=pltpu.CompilerParams(
            # The batch-block axis carries the loss accumulator -> sequential.
            dimension_semantics=("arbitrary",)),
    )(x, w3, rmat, coef)

    # Finalize (a handful of scalar flops) in plain JAX.
    rec = out[0]
    inv_w = 1.0 / rec[0]
    pos_f, neg_f = rec[1] * inv_w, rec[2] * inv_w
    pos_t, neg_t = rec[3] * inv_w, rec[4] * inv_w
    return (pos_f, neg_f, 0.5 * (pos_f + neg_f),
            pos_t, neg_t, 0.5 * (pos_t + neg_t))


# --------------------------------------------------------------------------
# StageLossModel.forward
# --------------------------------------------------------------------------
def stage_loss_forward(params, data, neg_entity_ids, subsampling_weight,
                       mode="tail-batch"):
    # TODO(synk): only the 'tail-batch' negative-sampling mode is implemented.
    ent_emb = params["ent_emb"]
    rel_emb = params["rel_emb"]
    w_ent = params["w_ent"]
    w_rel = params["w_rel"]
    prune_dim = params["prune_dim"]

    B = data.shape[0]
    D = ent_emb.shape[1]

    # EmbeddingManager(data, mode): plain-JAX gathers (glue).
    head = ent_emb[data[:, 0]]                                    # (B, D)
    rel = rel_emb[data[:, 1]]                                     # (B, D)
    cand = jnp.concatenate([data[:, 2:3], neg_entity_ids], 1)     # (B, 1+N)
    C = cand.shape[1]
    tail2d = ent_emb[cand].reshape(B * C, D)                      # (B*C, D)

    # TODO(synk): "tmp" prunes AFTER projection (first prune_dim output dims), matching
    # the original implementation choice; verify against the real EntityPruner.
    (pos_l, neg_l, loss,
     t_pos_l, t_neg_l, tmp_loss) = fused_stage_loss(
        head, rel, tail2d, w_ent, w_rel, subsampling_weight,
        prune_dim=prune_dim, num_cand=C)

    loss_record = {
        "positive_sample_loss": pos_l,
        "negative_sample_loss": neg_l,
        "loss": loss,
    }
    tmp_loss_record = {
        "positive_sample_loss": t_pos_l,
        "negative_sample_loss": t_neg_l,
        "loss": tmp_loss,
    }
    modified = {"tmp" + k: v for k, v in tmp_loss_record.items()}

    # TODO(synk): torch does `(loss + tmp_loss) // 2` (floor division on float
    # tensors); kept verbatim even though it is almost certainly a ported bug.
    final_loss = jnp.floor_divide(loss + tmp_loss, jnp.float32(2.0))
    loss_record.update(modified)
    return final_loss, loss_record


# --------------------------------------------------------------------------
if __name__ == "__main__":
    key = jax.random.PRNGKey(0)
    num_ent, num_rel = 256, 32
    B, N, D, Dp = 16, 15, 128, 64       # batch, negatives, dim (lane-aligned), pruned dim

    ks = jax.random.split(key, 9)
    params = {
        "ent_emb": 0.1 * jax.random.normal(ks[0], (num_ent, D), jnp.float32),
        "rel_emb": 0.1 * jax.random.normal(ks[1], (num_rel, D), jnp.float32),
        "w_ent": jax.random.normal(ks[2], (D, D), jnp.float32) / jnp.sqrt(D),
        "w_rel": jax.random.normal(ks[3], (D, D), jnp.float32) / jnp.sqrt(D),
        "prune_dim": Dp,
    }

    h_ids = jax.random.randint(ks[4], (B, 1), 0, num_ent)
    r_ids = jax.random.randint(ks[5], (B, 1), 0, num_rel)
    t_ids = jax.random.randint(ks[6], (B, 1), 0, num_ent)
    data = jnp.concatenate([h_ids, r_ids, t_ids], axis=1)                 # (B, 3)
    neg_ids = jax.random.randint(ks[7], (B, N), 0, num_ent)               # (B, N)
    subsampling_weight = 0.5 + jax.random.uniform(ks[8], (B,), jnp.float32)

    loss, record = stage_loss_forward(params, data, neg_ids, subsampling_weight,
                                      mode="tail-batch")
    jax.block_until_ready(loss)
    for v in record.values():
        jax.block_until_ready(v)
    print("KERNEL_OK")
</pallas_src>

<mosaic_0001>
module attributes {stable_mosaic.version = 11 : i64} {
  func.func @_stage_loss_kernel(%arg0: i32, %arg1: memref<256x384xbf16, #tpu.memory_space<vmem>>, %arg2: memref<384x128xbf16, #tpu.memory_space<vmem>>, %arg3: memref<8x128xbf16, #tpu.memory_space<vmem>>, %arg4: memref<2x256xf32, #tpu.memory_space<vmem>>, %arg5: memref<1x8xf32, #tpu.memory_space<vmem>>) attributes {dimension_semantics = [#tpu.dimension_semantics<arbitrary>], iteration_bounds = array<i64: 1>, scalar_prefetch = 0 : i64, scratch_operands = 0 : i64, tpu.core_type = #tpu.core_type<tc>, window_params = [{transform_indices = @transform_0, window_bounds = array<i64: 256, 384>}, {pipeline_mode = #tpu.pipeline_mode<synchronous>, transform_indices = @transform_1, window_bounds = array<i64: 384, 128>}, {pipeline_mode = #tpu.pipeline_mode<synchronous>, transform_indices = @transform_2, window_bounds = array<i64: 8, 128>}, {transform_indices = @transform_3, window_bounds = array<i64: 2, 256>}, {pipeline_mode = #tpu.pipeline_mode<synchronous>, transform_indices = @transform_4, window_bounds = array<i64: 1, 8>}]} {
    %c0 = arith.constant 0 : index
    %c0_0 = arith.constant 0 : index
    %0 = vector.load %arg1[%c0, %c0_0] : memref<256x384xbf16, #tpu.memory_space<vmem>>, vector<256x384xbf16>
    %c0_1 = arith.constant 0 : index
    %c0_2 = arith.constant 0 : index
    %1 = vector.load %arg2[%c0_1, %c0_2] : memref<384x128xbf16, #tpu.memory_space<vmem>>, vector<384x128xbf16>
    %cst = arith.constant dense<0.000000e+00> : vector<256x128xf32>
    %2 = tpu.matmul %0, %1, %cst {dimension_numbers = #tpu.dot_dimension_numbers<[1], [0], [0], [1], [0, 0, 1, 1], [], []>} : vector<256x384xbf16>, vector<384x128xbf16>, vector<256x128xf32> -> vector<256x128xf32>
    %3 = math.absf %2 : vector<256x128xf32>
    %4 = arith.truncf %3 : vector<256x128xf32> to vector<256x128xbf16>
    %c0_3 = arith.constant 0 : index
    %c0_4 = arith.constant 0 : index
    %5 = vector.load %arg3[%c0_3, %c0_4] : memref<8x128xbf16, #tpu.memory_space<vmem>>, vector<8x128xbf16>
    "tpu.trace_start"() <{level = 10 : i32, message = "rd,nd->rn"}> : () -> ()
    %cst_5 = arith.constant dense<0.000000e+00> : vector<8x256xf32>
    %6 = tpu.matmul %5, %4, %cst_5 {dimension_numbers = #tpu.dot_dimension_numbers<[1], [1], [0], [0], [0, 0, 1, 0], [], []>} : vector<8x128xbf16>, vector<256x128xbf16>, vector<8x256xf32> -> vector<8x256xf32>
    "tpu.trace_stop"() : () -> ()
    %7 = vector.extract_strided_slice %6 {offsets = [0, 0], sizes = [2, 256], strides = [1, 1]} : vector<8x256xf32> to vector<2x256xf32>
    %cst_6 = arith.constant 1.200000e+01 : f32
    %8 = vector.broadcast %cst_6 : f32 to vector<2x256xf32>
    %9 = arith.subf %8, %7 : vector<2x256xf32>
    %10 = math.absf %9 : vector<2x256xf32>
    %cst_7 = arith.constant 0.000000e+00 : f32
    %11 = vector.broadcast %cst_7 : f32 to vector<2x256xf32>
    %12 = arith.subf %11, %10 : vector<2x256xf32>
    %13 = math.exp %12 : vector<2x256xf32>
    %cst_8 = arith.constant 1.000000e+00 : f32
    %14 = vector.broadcast %cst_8 : f32 to vector<2x256xf32>
    %15 = arith.addf %14, %13 : vector<2x256xf32>
    %16 = math.log %15 : vector<2x256xf32>
    %cst_9 = arith.constant 0.000000e+00 : f32
    %17 = vector.broadcast %cst_9 : f32 to vector<2x256xf32>
    %18 = arith.minimumf %9, %17 : vector<2x256xf32>
    %19 = arith.subf %16, %18 : vector<2x256xf32>
    %cst_10 = arith.constant 0.000000e+00 : f32
    %20 = vector.broadcast %cst_10 : f32 to vector<2x256xf32>
    %21 = arith.maximumf %9, %20 : vector<2x256xf32>
    %22 = arith.addf %16, %21 : vector<2x256xf32>
    %c0_11 = arith.constant 0 : index
    %c0_12 = arith.constant 0 : index
    %23 = vector.load %arg4[%c0_11, %c0_12] : memref<2x256xf32, #tpu.memory_space<vmem>>, vector<1x256xf32>
    %c1 = arith.constant 1 : index
    %c0_13 = arith.constant 0 : index
    %24 = vector.load %arg4[%c1, %c0_13] : memref<2x256xf32, #tpu.memory_space<vmem>>, vector<1x256xf32>
    %25 = vector.broadcast %23 : vector<1x256xf32> to vector<2x256xf32>
    %26 = arith.mulf %25, %19 : vector<2x256xf32>
    %cst_14 = arith.constant dense<0.000000e+00> : vector<2xf32>
    %27 = vector.multi_reduction <add>, %26, %cst_14 [1] : vector<2x256xf32> to vector<2xf32>
    %28 = vector.shape_cast %27 : vector<2xf32> to vector<2x1xf32>
    %29 = vector.broadcast %24 : vector<1x256xf32> to vector<2x256xf32>
    %30 = arith.mulf %29, %22 : vector<2x256xf32>
    %cst_15 = arith.constant dense<0.000000e+00> : vector<2xf32>
    %31 = vector.multi_reduction <add>, %30, %cst_15 [1] : vector<2x256xf32> to vector<2xf32>
    %32 = vector.shape_cast %31 : vector<2xf32> to vector<2x1xf32>
    %cst_16 = arith.constant dense<0.000000e+00> : vector<1xf32>
    %33 = vector.multi_reduction <add>, %23, %cst_16 [1] : vector<1x256xf32> to vector<1xf32>
    %34 = vector.shape_cast %33 : vector<1xf32> to vector<1x1xf32>
    %35 = tpu.iota {dimensions = array<i32: 1>} : vector<1x8xi32>
    %c0_i32 = arith.constant 0 : i32
    %36 = vector.broadcast %c0_i32 : i32 to vector<1x8xi32>
    %37 = arith.cmpi eq, %35, %36 : vector<1x8xi32>
    %cst_17 = arith.constant 0.000000e+00 : f32
    %38 = vector.shape_cast %34 : vector<1x1xf32> to vector<1x1xf32>
    %39 = vector.broadcast %38 : vector<1x1xf32> to vector<1x8xf32>
    %40 = vector.broadcast %cst_17 : f32 to vector<1x8xf32>
    %41 = arith.select %37, %39, %40 : vector<1x8xi1>, vector<1x8xf32>
    %c1_i32 = arith.constant 1 : i32
    %42 = vector.broadcast %c1_i32 : i32 to vector<1x8xi32>
    %43 = arith.cmpi eq, %35, %42 : vector<1x8xi32>
    %44 = vector.extract_strided_slice %28 {offsets = [0, 0], sizes = [1, 1], strides = [1, 1]} : vector<2x1xf32> to vector<1x1xf32>
    %cst_18 = arith.constant 0.000000e+00 : f32
    %45 = vector.shape_cast %44 : vector<1x1xf32> to vector<1x1xf32>
    %46 = vector.broadcast %45 : vector<1x1xf32> to vector<1x8xf32>
    %47 = vector.broadcast %cst_18 : f32 to vector<1x8xf32>
    %48 = arith.select %43, %46, %47 : vector<1x8xi1>, vector<1x8xf32>
    %49 = arith.addf %41, %48 : vector<1x8xf32>
    %c2_i32 = arith.constant 2 : i32
    %50 = vector.broadcast %c2_i32 : i32 to vector<1x8xi32>
    %51 = arith.cmpi eq, %35, %50 : vector<1x8xi32>
    %52 = vector.extract_strided_slice %32 {offsets = [0, 0], sizes = [1, 1], strides = [1, 1]} : vector<2x1xf32> to vector<1x1xf32>
    %cst_19 = arith.constant 0.000000e+00 : f32
    %53 = vector.shape_cast %52 : vector<1x1xf32> to vector<1x1xf32>
    %54 = vector.broadcast %53 : vector<1x1xf32> to vector<1x8xf32>
    %55 = vector.broadcast %cst_19 : f32 to vector<1x8xf32>
    %56 = arith.select %51, %54, %55 : vector<1x8xi1>, vector<1x8xf32>
    %57 = arith.addf %49, %56 : vector<1x8xf32>
    %c3_i32 = arith.constant 3 : i32
    %58 = vector.broadcast %c3_i32 : i32 to vector<1x8xi32>
    %59 = arith.cmpi eq, %35, %58 : vector<1x8xi32>
    %60 = vector.extract_strided_slice %28 {offsets = [1, 0], sizes = [1, 1], strides = [1, 1]} : vector<2x1xf32> to vector<1x1xf32>
    %cst_20 = arith.constant 0.000000e+00 : f32
    %61 = vector.shape_cast %60 : vector<1x1xf32> to vector<1x1xf32>
    %62 = vector.broadcast %61 : vector<1x1xf32> to vector<1x8xf32>
    %63 = vector.broadcast %cst_20 : f32 to vector<1x8xf32>
    %64 = arith.select %59, %62, %63 : vector<1x8xi1>, vector<1x8xf32>
    %65 = arith.addf %57, %64 : vector<1x8xf32>
    %c4_i32 = arith.constant 4 : i32
    %66 = vector.broadcast %c4_i32 : i32 to vector<1x8xi32>
    %67 = arith.cmpi eq, %35, %66 : vector<1x8xi32>
    %68 = vector.extract_strided_slice %32 {offsets = [1, 0], sizes = [1, 1], strides = [1, 1]} : vector<2x1xf32> to vector<1x1xf32>
    %cst_21 = arith.constant 0.000000e+00 : f32
    %69 = vector.shape_cast %68 : vector<1x1xf32> to vector<1x1xf32>
    %70 = vector.broadcast %69 : vector<1x1xf32> to vector<1x8xf32>
    %71 = vector.broadcast %cst_21 : f32 to vector<1x8xf32>
    %72 = arith.select %67, %70, %71 : vector<1x8xi1>, vector<1x8xf32>
    %73 = arith.addf %65, %72 : vector<1x8xf32>
    %c0_i32_22 = arith.constant 0 : i32
    %74 = arith.cmpi eq, %arg0, %c0_i32_22 : i32
    %75 = arith.extui %74 : i1 to i32
    %c0_i32_23 = arith.constant 0 : i32
    %76 = arith.cmpi ne, %75, %c0_i32_23 : i32
    scf.if %76 {
      %cst_28 = arith.constant 0.000000e+00 : f32
      %80 = vector.broadcast %cst_28 : f32 to vector<1x8xf32>
      %c0_29 = arith.constant 0 : index
      %c0_30 = arith.constant 0 : index
      %81 = vector.load %arg5[%c0_29, %c0_30] : memref<1x8xf32, #tpu.memory_space<vmem>>, vector<1x8xf32>
      tpu.vector_store %arg5[%c0_29, %c0_30], %80 {strides = array<i32>} : memref<1x8xf32, #tpu.memory_space<vmem>>, vector<1x8xf32>,
    } else {
    }
    %c0_24 = arith.constant 0 : index
    %c0_25 = arith.constant 0 : index
    %77 = vector.load %arg5[%c0_24, %c0_25] : memref<1x8xf32, #tpu.memory_space<vmem>>, vector<1x8xf32>
    %78 = arith.addf %77, %73 : vector<1x8xf32>
    %c0_26 = arith.constant 0 : index
    %c0_27 = arith.constant 0 : index
    %79 = vector.load %arg5[%c0_26, %c0_27] : memref<1x8xf32, #tpu.memory_space<vmem>>, vector<1x8xf32>
    tpu.vector_store %arg5[%c0_26, %c0_27], %78 {strides = array<i32>} : memref<1x8xf32, #tpu.memory_space<vmem>>, vector<1x8xf32>,
    return
  }
  func.func @transform_0(%arg0: i32) -> (i32, i32) {
    %c0_i32 = arith.constant 0 : i32
    %c0_i32_0 = arith.constant 0 : i32
    return %arg0, %c0_i32 : i32, i32
  }
  func.func @transform_1(%arg0: i32) -> (i32, i32) {
    %c0_i32 = arith.constant 0 : i32
    %c0_i32_0 = arith.constant 0 : i32
    %c0_i32_1 = arith.constant 0 : i32
    return %c0_i32, %c0_i32_0 : i32, i32
  }
  func.func @transform_2(%arg0: i32) -> (i32, i32) {
    %c0_i32 = arith.constant 0 : i32
    %c0_i32_0 = arith.constant 0 : i32
    %c0_i32_1 = arith.constant 0 : i32
    return %c0_i32, %c0_i32_0 : i32, i32
  }
  func.func @transform_3(%arg0: i32) -> (i32, i32) {
    %c0_i32 = arith.constant 0 : i32
    %c0_i32_0 = arith.constant 0 : i32
    return %c0_i32, %arg0 : i32, i32
  }
  func.func @transform_4(%arg0: i32) -> (i32, i32) {
    %c0_i32 = arith.constant 0 : i32
    %c0_i32_0 = arith.constant 0 : i32
    %c0_i32_1 = arith.constant 0 : i32
    return %c0_i32, %c0_i32_0 : i32, i32
  }
}

</mosaic_0001>

<llo_original>
// kernel: tpu_custom_call.1
$region0: #{tpu_custom_call.1}
  #allocation0 [shape = 'u32[]', space=smem, size = 0x4, offset = 0x4, fixed_abs, tag = 'smem constant byte address 0x4 - core index']
  #allocation1 [shape = 'u32[144,128]{1,0:T(1,128)}', space=vmem, size = 0x12000, scoped, tag = 'internal scratch']
  %s0 = inlined_call_operand.hbm [shape: bf16[256,384], index: 0, kind: input, shape index: {}]
  %s1 = inlined_call_operand.hbm [shape: bf16[384,128], index: 1, kind: input, shape index: {}]
  %s2 = inlined_call_operand.vmem [shape: bf16[8,128], index: 2, kind: input, shape index: {}]
  %s3 = inlined_call_operand.vmem [shape: f32[2,256], index: 3, kind: input, shape index: {}]
  %s4 = inlined_call_operand.hbm [shape: f32[1,8], index: 4, kind: output, shape index: {}]
  %s5 = sld [smem:[#allocation0]]
  $region38: #{tpu_custom_call.1} parent=0
    _
  %s7 = ssub.s32 1, %s5
  %s8 = scalar_select 0, %s7, %s5
  $region1: #{tpu_custom_call.1} parent=0
    #allocation2 [shape = 'u8[196608]{0}', space=vmem, size = 0x30000, scoped, tag = 'input window, operand 0, single buffered']
    #allocation3 [shape = 's32[1]{0}', space=sflag, size = 0x4, scoped, tag = 'scoped memory for tpu_custom_call.1']
    #allocation4 [shape = 's32[1]{0}', space=sflag, size = 0x4, scoped, tag = 'scoped memory for tpu_custom_call.1']
    #allocation5 [shape = 'u8[98304]{0}', space=vmem, size = 0x18000, scoped, tag = 'input window, operand 1, single buffered']
    #allocation6 [shape = 's32[1]{0}', space=sflag, size = 0x4, scoped, tag = 'scoped memory for tpu_custom_call.1']
    #allocation7 [shape = 'u8[512]{0}', space=vmem, size = 0x400, scoped, tag = 'output window, operand 0, single buffered']
    %9 = vsyncpa [#allocation3], 0
    %10 = vsyncpa [#allocation6], 0
    %11 = vsyncpa [#allocation4], 0
    // Predicated region
    $region2: #{tpu_custom_call.1} parent=1 // pred_check
      _
    $region3: #{tpu_custom_call.1} parent=1 // pred_check_branch
      %13 = sbr.rel (0) target = $region5
    $region4: #{tpu_custom_call.1} parent=1 // pred_region
      %s15 = ssub.s32 6144, 6144
      %16 = vsyncadd [#allocation3], %s15
      %s17 = sshll.u32 [#allocation2], 4
      %s18 = int_to_ptr.vmem [resolvable:$true] %s17
      %23 = dma.hbm_to_vmem [thread:$0]  %s0, 6144, %s18, [#allocation3], 192, 192, 12
    $region5: #{tpu_custom_call.1} parent=1 // pred_fallthru
      _
    // Predicated region
    $region6: #{tpu_custom_call.1} parent=1 // pred_check
      _
    $region7: #{tpu_custom_call.1} parent=1 // pred_check_branch
      %25 = sbr.rel (0) target = $region9
    $region8: #{tpu_custom_call.1} parent=1 // pred_region
      %s27 = ssub.s32 3072, 3072
      %28 = vsyncadd [#allocation6], %s27
      %s29 = sshll.u32 [#allocation5], 4
      %s30 = int_to_ptr.vmem [resolvable:$true] %s29
      %35 = dma.hbm_to_vmem [thread:$0]  %s1, 3072, %s30, [#allocation6], 64, 64, 4
    $region9: #{tpu_custom_call.1} parent=1 // pred_fallthru
      _
    // Predicated region
    $region10: #{tpu_custom_call.1} parent=1 // pred_check
      _
    $region11: #{tpu_custom_call.1} parent=1 // pred_check_branch
      %37 = sbr.rel (0) target = $region13
    $region12: #{tpu_custom_call.1} parent=1 // pred_region
      _
    $region13: #{tpu_custom_call.1} parent=1 // pred_fallthru
      _
    // Predicated region
    $region14: #{tpu_custom_call.1} parent=1 // pred_check
      _
    $region15: #{tpu_custom_call.1} parent=1 // pred_check_branch
      %39 = sbr.rel (0) target = $region17
    $region16: #{tpu_custom_call.1} parent=1 // pred_region
      _
    $region17: #{tpu_custom_call.1} parent=1 // pred_fallthru
      _
    // Predicated region
    $region18: #{tpu_custom_call.1} parent=1 // pred_check
      _
    $region19: #{tpu_custom_call.1} parent=1 // pred_check_branch
      %41 = sbr.rel (0) target = $region21
    $region20: #{tpu_custom_call.1} parent=1 // pred_region
      %42 = dma.done [#allocation3], 6144
    $region21: #{tpu_custom_call.1} parent=1 // pred_fallthru
      _
    // Predicated region
    $region22: #{tpu_custom_call.1} parent=1 // pred_check
      _
    $region23: #{tpu_custom_call.1} parent=1 // pred_check_branch
      %44 = sbr.rel (0) target = $region25
    $region24: #{tpu_custom_call.1} parent=1 // pred_region
      %45 = dma.done [#allocation6], 3072
    $region25: #{tpu_custom_call.1} parent=1 // pred_fallthru
      _
    %v47 = vld [vmem:[#allocation2] sm:$0xff]
    %v48 = vld [vmem:[#allocation2 + $0x8] sm:$0xf]
    %v49 = vld [vmem:[#allocation2 + $0xc] sm:$0xff]
    %v50 = vld [vmem:[#allocation2 + $0x14] sm:$0xf]
    %v51 = vld [vmem:[#allocation2 + $0x18] sm:$0xff]
    %v52 = vld [vmem:[#allocation2 + $0x20] sm:$0xf]
    %v53 = vld [vmem:[#allocation2 + $0x24] sm:$0xff]
    %v54 = vld [vmem:[#allocation2 + $0x2c] sm:$0xf]
    %v55 = vld [vmem:[#allocation2 + $0x30] sm:$0xff]
    %v56 = vld [vmem:[#allocation2 + $0x38] sm:$0xf]
    %v57 = vld [vmem:[#allocation2 + $0x3c] sm:$0xff]
    %v58 = vld [vmem:[#allocation2 + $0x44] sm:$0xf]
    %v59 = vld [vmem:[#allocation2 + $0x48] sm:$0xff]
    %v60 = vld [vmem:[#allocation2 + $0x50] sm:$0xf]
    %v61 = vld [vmem:[#allocation2 + $0x54] sm:$0xff]
    %v62 = vld [vmem:[#allocation2 + $0x5c] sm:$0xf]
    %v63 = vld [vmem:[#allocation2 + $0x60] sm:$0xff]
    %v64 = vld [vmem:[#allocation2 + $0x68] sm:$0xf]
    %v65 = vld [vmem:[#allocation2 + $0x6c] sm:$0xff]
    %v66 = vld [vmem:[#allocation2 + $0x74] sm:$0xf]
    %v67 = vld [vmem:[#allocation2 + $0x78] sm:$0xff]
    %v68 = vld [vmem:[#allocation2 + $0x80] sm:$0xf]
    %v69 = vld [vmem:[#allocation2 + $0x84] sm:$0xff]
    %v70 = vld [vmem:[#allocation2 + $0x8c] sm:$0xf]
    %v71 = vld [vmem:[#allocation2 + $0x90] sm:$0xff]
    %v72 = vld [vmem:[#allocation2 + $0x98] sm:$0xf]
    %v73 = vld [vmem:[#allocation2 + $0x9c] sm:$0xff]
    %v74 = vld [vmem:[#allocation2 + $0xa4] sm:$0xf]
    %v75 = vld [vmem:[#allocation2 + $0xa8] sm:$0xff]
    %v76 = vld [vmem:[#allocation2 + $0xb0] sm:$0xf]
    %v77 = vld [vmem:[#allocation2 + $0xb4] sm:$0xff]
    %v78 = vld [vmem:[#allocation2 + $0xbc] sm:$0xf]
    %v79 = vld [vmem:[#allocation2 + $0xc0] sm:$0xff]
    %v80 = vld [vmem:[#allocation2 + $0xc8] sm:$0xf]
    %v81 = vld [vmem:[#allocation2 + $0xcc] sm:$0xff]
    %v82 = vld [vmem:[#allocation2 + $0xd4] sm:$0xf]
    %v83 = vld [vmem:[#allocation2 + $0xd8] sm:$0xff]
    %v84 = vld [vmem:[#allocation2 + $0xe0] sm:$0xf]
    %v85 = vld [vmem:[#allocation2 + $0xe4] sm:$0xff]
    %v86 = vld [vmem:[#allocation2 + $0xec] sm:$0xf]
    %v87 = vld [vmem:[#allocation2 + $0xf0] sm:$0xff]
    %v88 = vld [vmem:[#allocation2 + $0xf8] sm:$0xf]
    %v89 = vld [vmem:[#allocation2 + $0xfc] sm:$0xff]
    %v90 = vld [vmem:[#allocation2 + $0x104] sm:$0xf]
    %v91 = vld [vmem:[#allocation2 + $0x108] sm:$0xff]
    %v92 = vld [vmem:[#allocation2 + $0x110] sm:$0xf]
    %v93 = vld [vmem:[#allocation2 + $0x114] sm:$0xff]
    %v94 = vld [vmem:[#allocation2 + $0x11c] sm:$0xf]
    %v95 = vld [vmem:[#allocation2 + $0x120] sm:$0xff]
    %v96 = vld [vmem:[#allocation2 + $0x128] sm:$0xf]
    %v97 = vld [vmem:[#allocation2 + $0x12c] sm:$0xff]
    %v98 = vld [vmem:[#allocation2 + $0x134] sm:$0xf]
    %v99 = vld [vmem:[#allocation2 + $0x138] sm:$0xff]
    %v100 = vld [vmem:[#allocation2 + $0x140] sm:$0xf]
    %v101 = vld [vmem:[#allocation2 + $0x144] sm:$0xff]
    %v102 = vld [vmem:[#allocation2 + $0x14c] sm:$0xf]
    %v103 = vld [vmem:[#allocation2 + $0x150] sm:$0xff]
    %v104 = vld [vmem:[#allocation2 + $0x158] sm:$0xf]
    %v105 = vld [vmem:[#allocation2 + $0x15c] sm:$0xff]
    %v106 = vld [vmem:[#allocation2 + $0x164] sm:$0xf]
    %v107 = vld [vmem:[#allocation2 + $0x168] sm:$0xff]
    %v108 = vld [vmem:[#allocation2 + $0x170] sm:$0xf]
    %v109 = vld [vmem:[#allocation2 + $0x174] sm:$0xff]
    %v110 = vld [vmem:[#allocation2 + $0x17c] sm:$0xf]
    %v111 = vld [vmem:[#allocation5] sm:$0xf]
    %v112 = vld [vmem:[#allocation5 + $0x4] sm:$0xf]
    %v113 = vld [vmem:[#allocation5 + $0x8] sm:$0xf]
    %v114 = vld [vmem:[#allocation5 + $0xc] sm:$0xf]
    %v115 = vld [vmem:[#allocation5 + $0x10] sm:$0xf]
    %v116 = vld [vmem:[#allocation5 + $0x14] sm:$0xf]
    %v117 = vld [vmem:[#allocation5 + $0x18] sm:$0xf]
    %v118 = vld [vmem:[#allocation5 + $0x1c] sm:$0xf]
    %v119 = vld [vmem:[#allocation5 + $0x20] sm:$0xf]
    %v120 = vld [vmem:[#allocation5 + $0x24] sm:$0xf]
    %v121 = vld [vmem:[#allocation5 + $0x28] sm:$0xf]
    %v122 = vld [vmem:[#allocation5 + $0x2c] sm:$0xf]
    %v123 = vld [vmem:[#allocation5 + $0x30] sm:$0xf]
    %v124 = vld [vmem:[#allocation5 + $0x34] sm:$0xf]
    %v125 = vld [vmem:[#allocation5 + $0x38] sm:$0xf]
    %v126 = vld [vmem:[#allocation5 + $0x3c] sm:$0xf]
    %v127 = vld [vmem:[#allocation5 + $0x40] sm:$0xf]
    %v128 = vld [vmem:[#allocation5 + $0x44] sm:$0xf]
    %v129 = vld [vmem:[#allocation5 + $0x48] sm:$0xf]
    %v130 = vld [vmem:[#allocation5 + $0x4c] sm:$0xf]
    %v131 = vld [vmem:[#allocation5 + $0x50] sm:$0xf]
    %v132 = vld [vmem:[#allocation5 + $0x54] sm:$0xf]
    %v133 = vld [vmem:[#allocation5 + $0x58] sm:$0xf]
    %v134 = vld [vmem:[#allocation5 + $0x5c] sm:$0xf]
    %v135 = vld [vmem:[#allocation5 + $0x60] sm:$0xf]
    %v136 = vld [vmem:[#allocation5 + $0x64] sm:$0xf]
    %v137 = vld [vmem:[#allocation5 + $0x68] sm:$0xf]
    %v138 = vld [vmem:[#allocation5 + $0x6c] sm:$0xf]
    %v139 = vld [vmem:[#allocation5 + $0x70] sm:$0xf]
    %v140 = vld [vmem:[#allocation5 + $0x74] sm:$0xf]
    %v141 = vld [vmem:[#allocation5 + $0x78] sm:$0xf]
    %v142 = vld [vmem:[#allocation5 + $0x7c] sm:$0xf]
    %v143 = vld [vmem:[#allocation5 + $0x80] sm:$0xf]
    %v144 = vld [vmem:[#allocation5 + $0x84] sm:$0xf]
    %v145 = vld [vmem:[#allocation5 + $0x88] sm:$0xf]
    %v146 = vld [vmem:[#allocation5 + $0x8c] sm:$0xf]
    %v147 = vld [vmem:[#allocation5 + $0x90] sm:$0xf]
    %v148 = vld [vmem:[#allocation5 + $0x94] sm:$0xf]
    %v149 = vld [vmem:[#allocation5 + $0x98] sm:$0xf]
    %v150 = vld [vmem:[#allocation5 + $0x9c] sm:$0xf]
    %v151 = vld [vmem:[#allocation5 + $0xa0] sm:$0xf]
    %v152 = vld [vmem:[#allocation5 + $0xa4] sm:$0xf]
    %v153 = vld [vmem:[#allocation5 + $0xa8] sm:$0xf]
    %v154 = vld [vmem:[#allocation5 + $0xac] sm:$0xf]
    %v155 = vld [vmem:[#allocation5 + $0xb0] sm:$0xf]
    %v156 = vld [vmem:[#allocation5 + $0xb4] sm:$0xf]
    %v157 = vld [vmem:[#allocation5 + $0xb8] sm:$0xf]
    %v158 = vld [vmem:[#allocation5 + $0xbc] sm:$0xf]
    %v223 = vunpack.c.l.b16 %v47
    %v224 = vunpack.c.h.b16 %v47
    %v225 = vunpack.c.l.b16 %v48
    %v226 = vunpack.c.l.b16 %v49
    %v227 = vunpack.c.h.b16 %v49
    %v228 = vunpack.c.l.b16 %v50
    %v229 = vunpack.c.l.b16 %v51
    %v230 = vunpack.c.h.b16 %v51
    %v231 = vunpack.c.l.b16 %v52
    %v232 = vunpack.c.l.b16 %v53
    %v233 = vunpack.c.h.b16 %v53
    %v234 = vunpack.c.l.b16 %v54
    %v235 = vunpack.c.l.b16 %v55
    %v236 = vunpack.c.h.b16 %v55
    %v237 = vunpack.c.l.b16 %v56
    %v238 = vunpack.c.l.b16 %v57
    %v239 = vunpack.c.h.b16 %v57
    %v240 = vunpack.c.l.b16 %v58
    %v241 = vunpack.c.l.b16 %v59
    %v242 = vunpack.c.h.b16 %v59
    %v243 = vunpack.c.l.b16 %v60
    %v244 = vunpack.c.l.b16 %v61
    %v245 = vunpack.c.h.b16 %v61
    %v246 = vunpack.c.l.b16 %v62
    %v247 = vunpack.c.l.b16 %v63
    %v248 = vunpack.c.h.b16 %v63
    %v249 = vunpack.c.l.b16 %v64
    %v250 = vunpack.c.l.b16 %v65
    %v251 = vunpack.c.h.b16 %v65
    %v252 = vunpack.c.l.b16 %v66
    %v253 = vunpack.c.l.b16 %v67
    %v254 = vunpack.c.h.b16 %v67
    %v255 = vunpack.c.l.b16 %v68
    %v256 = vunpack.c.l.b16 %v69
    %v257 = vunpack.c.h.b16 %v69
    %v258 = vunpack.c.l.b16 %v70
    %v259 = vunpack.c.l.b16 %v71
    %v260 = vunpack.c.h.b16 %v71
    %v261 = vunpack.c.l.b16 %v72
    %v262 = vunpack.c.l.b16 %v73
    %v263 = vunpack.c.h.b16 %v73
    %v264 = vunpack.c.l.b16 %v74
    %v265 = vunpack.c.l.b16 %v75
    %v266 = vunpack.c.h.b16 %v75
    %v267 = vunpack.c.l.b16 %v76
    %v268 = vunpack.c.l.b16 %v77
    %v269 = vunpack.c.h.b16 %v77
    %v270 = vunpack.c.l.b16 %v78
    %v271 = vunpack.c.l.b16 %v79
    %v272 = vunpack.c.h.b16 %v79
    %v273 = vunpack.c.l.b16 %v80
    %v274 = vunpack.c.l.b16 %v81
    %v275 = vunpack.c.h.b16 %v81
    %v276 = vunpack.c.l.b16 %v82
    %v277 = vunpack.c.l.b16 %v83
    %v278 = vunpack.c.h.b16 %v83
    %v279 = vunpack.c.l.b16 %v84
    %v280 = vunpack.c.l.b16 %v85
    %v281 = vunpack.c.h.b16 %v85
    %v282 = vunpack.c.l.b16 %v86
    %v283 = vunpack.c.l.b16 %v87
    %v284 = vunpack.c.h.b16 %v87
    %v285 = vunpack.c.l.b16 %v88
    %v286 = vunpack.c.l.b16 %v89
    %v287 = vunpack.c.h.b16 %v89
    %v288 = vunpack.c.l.b16 %v90
    %v289 = vunpack.c.l.b16 %v91
    %v290 = vunpack.c.h.b16 %v91
    %v291 = vunpack.c.l.b16 %v92
    %v292 = vunpack.c.l.b16 %v93
    %v293 = vunpack.c.h.b16 %v93
    %v294 = vunpack.c.l.b16 %v94
    %v295 = vunpack.c.l.b16 %v95
    %v296 = vunpack.c.h.b16 %v95
    %v297 = vunpack.c.l.b16 %v96
    %v298 = vunpack.c.l.b16 %v97
    %v299 = vunpack.c.h.b16 %v97
    %v300 = vunpack.c.l.b16 %v98
    %v301 = vunpack.c.l.b16 %v99
    %v302 = vunpack.c.h.b16 %v99
    %v303 = vunpack.c.l.b16 %v100
    %v304 = vunpack.c.l.b16 %v101
    %v305 = vunpack.c.h.b16 %v101
    %v306 = vunpack.c.l.b16 %v102
    %v307 = vunpack.c.l.b16 %v103
    %v308 = vunpack.c.h.b16 %v103
    %v309 = vunpack.c.l.b16 %v104
    %v310 = vunpack.c.l.b16 %v105
    %v311 = vunpack.c.h.b16 %v105
    %v312 = vunpack.c.l.b16 %v106
    %v313 = vunpack.c.l.b16 %v107
    %v314 = vunpack.c.h.b16 %v107
    %v315 = vunpack.c.l.b16 %v108
    %v316 = vunpack.c.l.b16 %v109
    %v317 = vunpack.c.h.b16 %v109
    %v318 = vunpack.c.l.b16 %v110
    %v319 = vpack.c.b16 %v226, %v223
    %v320 = vpack.c.b16 %v227, %v224
    %v321 = vpack.c.b16 %v228, %v225
    %v322 = vpack.c.b16 %v232, %v229
    %v323 = vpack.c.b16 %v233, %v230
    %v324 = vpack.c.b16 %v234, %v231
    %v325 = vpack.c.b16 %v238, %v235
    %v326 = vpack.c.b16 %v239, %v236
    %v327 = vpack.c.b16 %v240, %v237
    %v328 = vpack.c.b16 %v244, %v241
    %v329 = vpack.c.b16 %v245, %v242
    %v330 = vpack.c.b16 %v246, %v243
    %v331 = vpack.c.b16 %v250, %v247
    %v332 = vpack.c.b16 %v251, %v248
    %v333 = vpack.c.b16 %v252, %v249
    %v334 = vpack.c.b16 %v256, %v253
    %v335 = vpack.c.b16 %v257, %v254
    %v336 = vpack.c.b16 %v258, %v255
    %v337 = vpack.c.b16 %v262, %v259
    %v338 = vpack.c.b16 %v263, %v260
    %v339 = vpack.c.b16 %v264, %v261
    %v340 = vpack.c.b16 %v268, %v265
    %v341 = vpack.c.b16 %v269, %v266
    %v342 = vpack.c.b16 %v270, %v267
    %v343 = vpack.c.b16 %v274, %v271
    %v344 = vpack.c.b16 %v275, %v272
    %v345 = vpack.c.b16 %v276, %v273
    %v346 = vpack.c.b16 %v280, %v277
    %v347 = vpack.c.b16 %v281, %v278
    %v348 = vpack.c.b16 %v282, %v279
    %v349 = vpack.c.b16 %v286, %v283
    %v350 = vpack.c.b16 %v287, %v284
    %v351 = vpack.c.b16 %v288, %v285
    %v352 = vpack.c.b16 %v292, %v289
    %v353 = vpack.c.b16 %v293, %v290
    %v354 = vpack.c.b16 %v294, %v291
    %v355 = vpack.c.b16 %v298, %v295
    %v356 = vpack.c.b16 %v299, %v296
    %v357 = vpack.c.b16 %v300, %v297
    %v358 = vpack.c.b16 %v304, %v301
    %v359 = vpack.c.b16 %v305, %v302
    %v360 = vpack.c.b16 %v306, %v303
    %v361 = vpack.c.b16 %v310, %v307
    %v362 = vpack.c.b16 %v311, %v308
    %v363 = vpack.c.b16 %v312, %v309
    %v364 = vpack.c.b16 %v316, %v313
    %v365 = vpack.c.b16 %v317, %v314
    %v366 = vpack.c.b16 %v318, %v315
    %v463 = vunpack.c.l.b16 %v111
    %v464 = vunpack.c.l.b16 %v112
    %v465 = vunpack.c.l.b16 %v113
    %v466 = vunpack.c.l.b16 %v114
    %v467 = vunpack.c.l.b16 %v115
    %v468 = vunpack.c.l.b16 %v116
    %v469 = vunpack.c.l.b16 %v117
    %v470 = vunpack.c.l.b16 %v118
    %v471 = vunpack.c.l.b16 %v119
    %v472 = vunpack.c.l.b16 %v120
    %v473 = vunpack.c.l.b16 %v121
    %v474 = vunpack.c.l.b16 %v122
    %v475 = vunpack.c.l.b16 %v123
    %v476 = vunpack.c.l.b16 %v124
    %v477 = vunpack.c.l.b16 %v125
    %v478 = vunpack.c.l.b16 %v126
    %v479 = vunpack.c.l.b16 %v127
    %v480 = vunpack.c.l.b16 %v128
    %v481 = vunpack.c.l.b16 %v129
    %v482 = vunpack.c.l.b16 %v130
    %v483 = vunpack.c.l.b16 %v131
    %v484 = vunpack.c.l.b16 %v132
    %v485 = vunpack.c.l.b16 %v133
    %v486 = vunpack.c.l.b16 %v134
    %v487 = vunpack.c.l.b16 %v135
    %v488 = vunpack.c.l.b16 %v136
    %v489 = vunpack.c.l.b16 %v137
    %v490 = vunpack.c.l.b16 %v138
    %v491 = vunpack.c.l.b16 %v139
    %v492 = vunpack.c.l.b16 %v140
    %v493 = vunpack.c.l.b16 %v141
    %v494 = vunpack.c.l.b16 %v142
    %v495 = vunpack.c.l.b16 %v143
    %v496 = vunpack.c.l.b16 %v144
    %v497 = vunpack.c.l.b16 %v145
    %v498 = vunpack.c.l.b16 %v146
    %v499 = vunpack.c.l.b16 %v147
    %v500 = vunpack.c.l.b16 %v148
    %v501 = vunpack.c.l.b16 %v149
    %v502 = vunpack.c.l.b16 %v150
    %v503 = vunpack.c.l.b16 %v151
    %v504 = vunpack.c.l.b16 %v152
    %v505 = vunpack.c.l.b16 %v153
    %v506 = vunpack.c.l.b16 %v154
    %v507 = vunpack.c.l.b16 %v155
    %v508 = vunpack.c.l.b16 %v156
    %v509 = vunpack.c.l.b16 %v157
    %v510 = vunpack.c.l.b16 %v158
    %v511 = vpack.c.b16 %v464, %v463
    %v512 = vpack.c.b16 %v466, %v465
    %v513 = vpack.c.b16 %v468, %v467
    %v514 = vpack.c.b16 %v470, %v469
    %v515 = vpack.c.b16 %v472, %v471
    %v516 = vpack.c.b16 %v474, %v473
    %v517 = vpack.c.b16 %v476, %v475
    %v518 = vpack.c.b16 %v478, %v477
    %v519 = vpack.c.b16 %v480, %v479
    %v520 = vpack.c.b16 %v482, %v481
    %v521 = vpack.c.b16 %v484, %v483
    %v522 = vpack.c.b16 %v486, %v485
    %v523 = vpack.c.b16 %v488, %v487
    %v524 = vpack.c.b16 %v490, %v489
    %v525 = vpack.c.b16 %v492, %v491
    %v526 = vpack.c.b16 %v494, %v493
    %v527 = vpack.c.b16 %v496, %v495
    %v528 = vpack.c.b16 %v498, %v497
    %v529 = vpack.c.b16 %v500, %v499
    %v530 = vpack.c.b16 %v502, %v501
    %v531 = vpack.c.b16 %v504, %v503
    %v532 = vpack.c.b16 %v506, %v505
    %v533 = vpack.c.b16 %v508, %v507
    %v534 = vpack.c.b16 %v510, %v509
    %559 = vmatprep.subr.bf16.mxu0 0
    %560 = vmatpush1.bf16.msra.mxu0 %v511
    %561 = vmatprep.subr.bf16.mxu0 0
    %562 = vmatpush1.bf16.msra.mxu0 %v512
    %563 = vmatprep.subr.bf16.mxu0 0
    %564 = vmatpush1.bf16.msra.mxu0 %v513
    %565 = vmatprep.subr.bf16.mxu0 0
    %566 = vmatpush1.bf16.msra.mxu0 %v514
    %567 = vmatprep.subr.bf16.mxu0 0
    %568 = vmatpush1.bf16.msra.mxu0 %v515
    %569 = vmatprep.subr.bf16.mxu0 0
    %570 = vmatpush1.bf16.msra.mxu0 %v516
    %571 = vmatprep.subr.bf16.mxu0 0
    %572 = vmatpush1.bf16.msra.mxu0 %v517
    %573 = vmatprep.subr.bf16.mxu0 0
    %574 = vmatpush1.bf16.msra.mxu0 %v518
    %575 = vmatprep.subr.bf16.mxu0 0
    %576 = vmatpush1.bf16.msra.mxu0 %v519
    %577 = vmatprep.subr.bf16.mxu0 0
    %578 = vmatpush1.bf16.msra.mxu0 %v520
    %579 = vmatprep.subr.bf16.mxu0 0
    %580 = vmatpush1.bf16.msra.mxu0 %v521
    %581 = vmatprep.subr.bf16.mxu0 0
    %582 = vmatpush1.bf16.msra.mxu0 %v522
    %583 = vmatprep.subr.bf16.mxu0 0
    %584 = vmatpush1.bf16.msra.mxu0 %v523
    %585 = vmatprep.subr.bf16.mxu0 0
    %586 = vmatpush1.bf16.msra.mxu0 %v524
    %587 = vmatprep.subr.bf16.mxu0 0
    %588 = vmatpush1.bf16.msra.mxu0 %v525
    %589 = vmatprep.subr.bf16.mxu0 0
    %590 = vmatpush1.bf16.msra.mxu0 %v526
    %591 = vmatprep.mubr.bf16.mxu0 %v320
    %592 = vmatmul.mubr.bf16.gmra.mrb[0].mxu0 %v319
    %v593 = vpop.f32.mrb[0].mxu0
    %v594 = vadd.f32 0.0, %v593
    %v595 = vpop.f32.mrb[0].mxu0
    %v596 = vpop.f32.mrb[0].mxu0
    %v597 = vadd.f32 0.0, %v596
    %v598 = vpop.f32.mrb[0].mxu0
    %599 = vmatprep.mubr.bf16.mxu0 %v323
    %600 = vmatmul.mubr.bf16.gmra.mrb[0].mxu0 %v322
    %v601 = vpop.f32.mrb[0].mxu0
    %v602 = vadd.f32 0.0, %v601
    %v603 = vpop.f32.mrb[0].mxu0
    %v604 = vpop.f32.mrb[0].mxu0
    %v605 = vadd.f32 0.0, %v604
    %v606 = vpop.f32.mrb[0].mxu0
    %607 = vmatprep.mubr.bf16.mxu0 %v326
    %608 = vmatmul.mubr.bf16.gmra.mrb[0].mxu0 %v325
    %v609 = vpop.f32.mrb[0].mxu0
    %v610 = vadd.f32 0.0, %v609
    %v611 = vpop.f32.mrb[0].mxu0
    %v612 = vpop.f32.mrb[0].mxu0
    %v613 = vadd.f32 0.0, %v612
    %v614 = vpop.f32.mrb[0].mxu0
    %615 = vmatprep.mubr.bf16.mxu0 %v329
    %616 = vmatmul.mubr.bf16.gmra.mrb[0].mxu0 %v328
    %v617 = vpop.f32.mrb[0].mxu0
    %v618 = vadd.f32 0.0, %v617
    %v619 = vpop.f32.mrb[0].mxu0
    %v620 = vpop.f32.mrb[0].mxu0
    %v621 = vadd.f32 0.0, %v620
    %v622 = vpop.f32.mrb[0].mxu0
    %623 = vmatprep.mubr.bf16.mxu0 %v332
    %624 = vmatmul.mubr.bf16.gmra.mrb[0].mxu0 %v331
    %v625 = vpop.f32.mrb[0].mxu0
    %v626 = vadd.f32 0.0, %v625
    %v627 = vpop.f32.mrb[0].mxu0
    %v628 = vpop.f32.mrb[0].mxu0
    %v629 = vadd.f32 0.0, %v628
    %v630 = vpop.f32.mrb[0].mxu0
    %631 = vmatprep.mubr.bf16.mxu0 %v335
    %632 = vmatmul.mubr.bf16.gmra.mrb[0].mxu0 %v334
    %v633 = vpop.f32.mrb[0].mxu0
    %v634 = vadd.f32 0.0, %v633
    %v635 = vpop.f32.mrb[0].mxu0
    %v636 = vpop.f32.mrb[0].mxu0
    %v637 = vadd.f32 0.0, %v636
    %v638 = vpop.f32.mrb[0].mxu0
    %639 = vmatprep.mubr.bf16.mxu0 %v338
    %640 = vmatmul.mubr.bf16.gmra.mrb[0].mxu0 %v337
    %v641 = vpop.f32.mrb[0].mxu0
    %v642 = vadd.f32 0.0, %v641
    %v643 = vpop.f32.mrb[0].mxu0
    %v644 = vpop.f32.mrb[0].mxu0
    %v645 = vadd.f32 0.0, %v644
    %v646 = vpop.f32.mrb[0].mxu0
    %647 = vmatprep.mubr.bf16.mxu0 %v341
    %648 = vmatmul.mubr.bf16.gmra.mrb[0].mxu0 %v340
    %v649 = vpop.f32.mrb[0].mxu0
    %v650 = vadd.f32 0.0, %v649
    %v651 = vpop.f32.mrb[0].mxu0
    %v652 = vpop.f32.mrb[0].mxu0
    %v653 = vadd.f32 0.0, %v652
    %v654 = vpop.f32.mrb[0].mxu0
    %655 = vmatprep.mubr.bf16.mxu0 %v344
    %656 = vmatmul.mubr.bf16.gmra.mrb[0].mxu0 %v343
    %v657 = vpop.f32.mrb[0].mxu0
    %v658 = vadd.f32 0.0, %v657
    %v659 = vpop.f32.mrb[0].mxu0
    %v660 = vpop.f32.mrb[0].mxu0
    %v661 = vadd.f32 0.0, %v660
    %v662 = vpop.f32.mrb[0].mxu0
    %663 = vmatprep.mubr.bf16.mxu0 %v347
    %664 = vmatmul.mubr.bf16.gmra.mrb[0].mxu0 %v346
    %v665 = vpop.f32.mrb[0].mxu0
    %v666 = vadd.f32 0.0, %v665
    %v667 = vpop.f32.mrb[0].mxu0
    %v668 = vpop.f32.mrb[0].mxu0
    %v669 = vadd.f32 0.0, %v668
    %v670 = vpop.f32.mrb[0].mxu0
    %671 = vmatprep.mubr.bf16.mxu0 %v350
    %672 = vmatmul.mubr.bf16.gmra.mrb[0].mxu0 %v349
    %v673 = vpop.f32.mrb[0].mxu0
    %v674 = vadd.f32 0.0, %v673
    %v675 = vpop.f32.mrb[0].mxu0
    %v676 = vpop.f32.mrb[0].mxu0
    %v677 = vadd.f32 0.0, %v676
    %v678 = vpop.f32.mrb[0].mxu0
    %679 = vmatprep.mubr.bf16.mxu0 %v353
    %680 = vmatmul.mubr.bf16.gmra.mrb[0].mxu0 %v352
    %v681 = vpop.f32.mrb[0].mxu0
    %v682 = vadd.f32 0.0, %v681
    %v683 = vpop.f32.mrb[0].mxu0
    %v684 = vpop.f32.mrb[0].mxu0
    %v685 = vadd.f32 0.0, %v684
    %v686 = vpop.f32.mrb[0].mxu0
    %687 = vmatprep.mubr.bf16.mxu0 %v356
    %688 = vmatmul.mubr.bf16.gmra.mrb[0].mxu0 %v355
    %v689 = vpop.f32.mrb[0].mxu0
    %v690 = vadd.f32 0.0, %v689
    %v691 = vpop.f32.mrb[0].mxu0
    %v692 = vpop.f32.mrb[0].mxu0
    %v693 = vadd.f32 0.0, %v692
    %v694 = vpop.f32.mrb[0].mxu0
    %695 = vmatprep.mubr.bf16.mxu0 %v359
    %696 = vmatmul.mubr.bf16.gmra.mrb[0].mxu0 %v358
    %v697 = vpop.f32.mrb[0].mxu0
    %v698 = vadd.f32 0.0, %v697
    %v699 = vpop.f32.mrb[0].mxu0
    %v700 = vpop.f32.mrb[0].mxu0
    %v701 = vadd.f32 0.0, %v700
    %v702 = vpop.f32.mrb[0].mxu0
    %703 = vmatprep.mubr.bf16.mxu0 %v362
    %704 = vmatmul.mubr.bf16.gmra.mrb[0].mxu0 %v361
    %v705 = vpop.f32.mrb[0].mxu0
    %v706 = vadd.f32 0.0, %v705
    %v707 = vpop.f32.mrb[0].mxu0
    %v708 = vpop.f32.mrb[0].mxu0
    %v709 = vadd.f32 0.0, %v708
    %v710 = vpop.f32.mrb[0].mxu0
    %711 = vmatprep.mubr.bf16.mxu0 %v365
    %712 = vmatmul.mubr.bf16.gmra.mrb[0].mxu0 %v364
    %v713 = vpop.f32.mrb[0].mxu0
    %v714 = vadd.f32 0.0, %v713
    %v715 = vpop.f32.mrb[0].mxu0
    %v716 = vpop.f32.mrb[0].mxu0
    %v717 = vadd.f32 0.0, %v716
    %v718 = vpop.f32.mrb[0].mxu0
    %719 = vdwg.mxu0
    %720 = vmatprep.subr.bf16.mxu0 0
    %721 = vmatpush1.bf16.msra.mxu0 %v527
    %722 = vmatprep.subr.bf16.mxu0 0
    %723 = vmatpush1.bf16.msra.mxu0 %v528
    %724 = vmatprep.subr.bf16.mxu0 0
    %725 = vmatpush1.bf16.msra.mxu0 %v529
    %726 = vmatprep.subr.bf16.mxu0 0
    %727 = vmatpush1.bf16.msra.mxu0 %v530
    %728 = vmatprep.subr.bf16.mxu0 0
    %729 = vmatpush1.bf16.msra.mxu0 %v531
    %730 = vmatprep.subr.bf16.mxu0 0
    %731 = vmatpush1.bf16.msra.mxu0 %v532
    %732 = vmatprep.subr.bf16.mxu0 0
    %733 = vmatpush1.bf16.msra.mxu0 %v533
    %734 = vmatprep.subr.bf16.mxu0 0
    %735 = vmatpush1.bf16.msra.mxu0 %v534
    %736 = vmatprep.subr.bf16.mxu0 0
    %737 = vmatpush1.bf16.msra.mxu0 0
    %738 = vmatprep.subr.bf16.mxu0 0
    %739 = vmatpush1.bf16.msra.mxu0 0
    %740 = vmatprep.subr.bf16.mxu0 0
    %741 = vmatpush1.bf16.msra.mxu0 0
    %742 = vmatprep.subr.bf16.mxu0 0
    %743 = vmatpush1.bf16.msra.mxu0 0
    %744 = vmatprep.subr.bf16.mxu0 0
    %745 = vmatpush1.bf16.msra.mxu0 0
    %746 = vmatprep.subr.bf16.mxu0 0
    %747 = vmatpush1.bf16.msra.mxu0 0
    %748 = vmatprep.subr.bf16.mxu0 0
    %749 = vmatpush1.bf16.msra.mxu0 0
    %750 = vmatprep.subr.bf16.mxu0 0
    %751 = vmatpush1.bf16.msra.mxu0 0
    %752 = vmatprep.mubr.bf16.mxu0 0
    %753 = vmatmul.mubr.bf16.gmra.mrb[0].mxu0 %v321
    %v754 = vpop.f32.mrb[0].mxu0
    %v755 = vadd.f32 %v594, %v754
    %v756 = vpop.f32.mrb[0].mxu0
    %v757 = vpop.f32.mrb[0].mxu0
    %v758 = vadd.f32 %v597, %v757
    %v759 = vpop.f32.mrb[0].mxu0
    %760 = vmatprep.mubr.bf16.mxu0 0
    %761 = vmatmul.mubr.bf16.gmra.mrb[0].mxu0 %v324
    %v762 = vpop.f32.mrb[0].mxu0
    %v763 = vadd.f32 %v602, %v762
    %v764 = vpop.f32.mrb[0].mxu0
    %v765 = vpop.f32.mrb[0].mxu0
    %v766 = vadd.f32 %v605, %v765
    %v767 = vpop.f32.mrb[0].mxu0
    %768 = vmatprep.mubr.bf16.mxu0 0
    %769 = vmatmul.mubr.bf16.gmra.mrb[0].mxu0 %v327
    %v770 = vpop.f32.mrb[0].mxu0
    %v771 = vadd.f32 %v610, %v770
    %v772 = vpop.f32.mrb[0].mxu0
    %v773 = vpop.f32.mrb[0].mxu0
    %v774 = vadd.f32 %v613, %v773
    %v775 = vpop.f32.mrb[0].mxu0
    %776 = vmatprep.mubr.bf16.mxu0 0
    %777 = vmatmul.mubr.bf16.gmra.mrb[0].mxu0 %v330
    %v778 = vpop.f32.mrb[0].mxu0
    %v779 = vadd.f32 %v618, %v778
    %v780 = vpop.f32.mrb[0].mxu0
    %v781 = vpop.f32.mrb[0].mxu0
    %v782 = vadd.f32 %v621, %v781
    %v783 = vpop.f32.mrb[0].mxu0
    %784 = vmatprep.mubr.bf16.mxu0 0
    %785 = vmatmul.mubr.bf16.gmra.mrb[0].mxu0 %v333
    %v786 = vpop.f32.mrb[0].mxu0
    %v787 = vadd.f32 %v626, %v786
    %v788 = vpop.f32.mrb[0].mxu0
    %v789 = vpop.f32.mrb[0].mxu0
    %v790 = vadd.f32 %v629, %v789
    %v791 = vpop.f32.mrb[0].mxu0
    %792 = vmatprep.mubr.bf16.mxu0 0
    %793 = vmatmul.mubr.bf16.gmra.mrb[0].mxu0 %v336
    %v794 = vpop.f32.mrb[0].mxu0
    %v795 = vadd.f32 %v634, %v794
    %v796 = vpop.f32.mrb[0].mxu0
    %v797 = vpop.f32.mrb[0].mxu0
    %v798 = vadd.f32 %v637, %v797
    %v799 = vpop.f32.mrb[0].mxu0
    %800 = vmatprep.mubr.bf16.mxu0 0
    %801 = vmatmul.mubr.bf16.gmra.mrb[0].mxu0 %v339
    %v802 = vpop.f32.mrb[0].mxu0
    %v803 = vadd.f32 %v642, %v802
    %v804 = vpop.f32.mrb[0].mxu0
    %v805 = vpop.f32.mrb[0].mxu0
    %v806 = vadd.f32 %v645, %v805
    %v807 = vpop.f32.mrb[0].mxu0
    %808 = vmatprep.mubr.bf16.mxu0 0
    %809 = vmatmul.mubr.bf16.gmra.mrb[0].mxu0 %v342
    %v810 = vpop.f32.mrb[0].mxu0
    %v811 = vadd.f32 %v650, %v810
    %v812 = vpop.f32.mrb[0].mxu0
    %v813 = vpop.f32.mrb[0].mxu0
    %v814 = vadd.f32 %v653, %v813
    %v815 = vpop.f32.mrb[0].mxu0
    %816 = vmatprep.mubr.bf16.mxu0 0
    %817 = vmatmul.mubr.bf16.gmra.mrb[0].mxu0 %v345
    %v818 = vpop.f32.mrb[0].mxu0
    %v819 = vadd.f32 %v658, %v818
    %v820 = vpop.f32.mrb[0].mxu0
    %v821 = vpop.f32.mrb[0].mxu0
    %v822 = vadd.f32 %v661, %v821
    %v823 = vpop.f32.mrb[0].mxu0
    %824 = vmatprep.mubr.bf16.mxu0 0
    %825 = vmatmul.mubr.bf16.gmra.mrb[0].mxu0 %v348
    %v826 = vpop.f32.mrb[0].mxu0
    %v827 = vadd.f32 %v666, %v826
    %v828 = vpop.f32.mrb[0].mxu0
    %v829 = vpop.f32.mrb[0].mxu0
    %v830 = vadd.f32 %v669, %v829
    %v831 = vpop.f32.mrb[0].mxu0
    %832 = vmatprep.mubr.bf16.mxu0 0
    %833 = vmatmul.mubr.bf16.gmra.mrb[0].mxu0 %v351
    %v834 = vpop.f32.mrb[0].mxu0
    %v835 = vadd.f32 %v674, %v834
    %v836 = vpop.f32.mrb[0].mxu0
    %v837 = vpop.f32.mrb[0].mxu0
    %v838 = vadd.f32 %v677, %v837
    %v839 = vpop.f32.mrb[0].mxu0
    %840 = vmatprep.mubr.bf16.mxu0 0
    %841 = vmatmul.mubr.bf16.gmra.mrb[0].mxu0 %v354
    %v842 = vpop.f32.mrb[0].mxu0
    %v843 = vadd.f32 %v682, %v842
    %v844 = vpop.f32.mrb[0].mxu0
    %v845 = vpop.f32.mrb[0].mxu0
    %v846 = vadd.f32 %v685, %v845
    %v847 = vpop.f32.mrb[0].mxu0
    %848 = vmatprep.mubr.bf16.mxu0 0
    %849 = vmatmul.mubr.bf16.gmra.mrb[0].mxu0 %v357
    %v850 = vpop.f32.mrb[0].mxu0
    %v851 = vadd.f32 %v690, %v850
    %v852 = vpop.f32.mrb[0].mxu0
    %v853 = vpop.f32.mrb[0].mxu0
    %v854 = vadd.f32 %v693, %v853
    %v855 = vpop.f32.mrb[0].mxu0
    %856 = vmatprep.mubr.bf16.mxu0 0
    %857 = vmatmul.mubr.bf16.gmra.mrb[0].mxu0 %v360
    %v858 = vpop.f32.mrb[0].mxu0
    %v859 = vadd.f32 %v698, %v858
    %v860 = vpop.f32.mrb[0].mxu0
    %v861 = vpop.f32.mrb[0].mxu0
    %v862 = vadd.f32 %v701, %v861
    %v863 = vpop.f32.mrb[0].mxu0
    %864 = vmatprep.mubr.bf16.mxu0 0
    %865 = vmatmul.mubr.bf16.gmra.mrb[0].mxu0 %v363
    %v866 = vpop.f32.mrb[0].mxu0
    %v867 = vadd.f32 %v706, %v866
    %v868 = vpop.f32.mrb[0].mxu0
    %v869 = vpop.f32.mrb[0].mxu0
    %v870 = vadd.f32 %v709, %v869
    %v871 = vpop.f32.mrb[0].mxu0
    %872 = vmatprep.mubr.bf16.mxu0 0
    %873 = vmatmul.mubr.bf16.gmra.mrb[0].mxu0 %v366
    %v874 = vpop.f32.mrb[0].mxu0
    %v875 = vadd.f32 %v714, %v874
    %v876 = vpop.f32.mrb[0].mxu0
    %v877 = vpop.f32.mrb[0].mxu0
    %v878 = vadd.f32 %v717, %v877
    %v879 = vpop.f32.mrb[0].mxu0
    %880 = vdwg.mxu0
    %v881 = vand.u32 2147483647, %v755
    %v882 = vand.u32 2147483647, %v758
    %v883 = vand.u32 2147483647, %v763
    %v884 = vand.u32 2147483647, %v766
    %v885 = vand.u32 2147483647, %v771
    %v886 = vand.u32 2147483647, %v774
    %v887 = vand.u32 2147483647, %v779
    %v888 = vand.u32 2147483647, %v782
    %v889 = vand.u32 2147483647, %v787
    %v890 = vand.u32 2147483647, %v790
    %v891 = vand.u32 2147483647, %v795
    %v892 = vand.u32 2147483647, %v798
    %v893 = vand.u32 2147483647, %v803
    %v894 = vand.u32 2147483647, %v806
    %v895 = vand.u32 2147483647, %v811
    %v896 = vand.u32 2147483647, %v814
    %v897 = vand.u32 2147483647, %v819
    %v898 = vand.u32 2147483647, %v822
    %v899 = vand.u32 2147483647, %v827
    %v900 = vand.u32 2147483647, %v830
    %v901 = vand.u32 2147483647, %v835
    %v902 = vand.u32 2147483647, %v838
    %v903 = vand.u32 2147483647, %v843
    %v904 = vand.u32 2147483647, %v846
    %v905 = vand.u32 2147483647, %v851
    %v906 = vand.u32 2147483647, %v854
    %v907 = vand.u32 2147483647, %v859
    %v908 = vand.u32 2147483647, %v862
    %v909 = vand.u32 2147483647, %v867
    %v910 = vand.u32 2147483647, %v870
    %v911 = vand.u32 2147483647, %v875
    %v912 = vand.u32 2147483647, %v878
    %v913 = vpack.c.bf16 %v882, %v881
    %v914 = vpack.c.bf16 %v884, %v883
    %v915 = vpack.c.bf16 %v886, %v885
    %v916 = vpack.c.bf16 %v888, %v887
    %v917 = vpack.c.bf16 %v890, %v889
    %v918 = vpack.c.bf16 %v892, %v891
    %v919 = vpack.c.bf16 %v894, %v893
    %v920 = vpack.c.bf16 %v896, %v895
    %v921 = vpack.c.bf16 %v898, %v897
    %v922 = vpack.c.bf16 %v900, %v899
    %v923 = vpack.c.bf16 %v902, %v901
    %v924 = vpack.c.bf16 %v904, %v903
    %v925 = vpack.c.bf16 %v906, %v905
    %v926 = vpack.c.bf16 %v908, %v907
    %v927 = vpack.c.bf16 %v910, %v909
    %v928 = vpack.c.bf16 %v912, %v911
    %v929 = vld [vmem:[%s2] sm:$0xf]
    %930 = vmatprep.subr.bf16.mxu0 0
    %931 = vmatpush1.bf16.xpose.msra.mxu0 %v913
    %932 = vmatprep.subr.bf16.mxu0 0
    %933 = vmatpush1.bf16.xpose.msra.mxu0 %v914
    %934 = vmatprep.subr.bf16.mxu0 0
    %935 = vmatpush1.bf16.xpose.msra.mxu0 %v915
    %936 = vmatprep.subr.bf16.mxu0 0
    %937 = vmatpush1.bf16.xpose.msra.mxu0 %v916
    %938 = vmatprep.subr.bf16.mxu0 0
    %939 = vmatpush1.bf16.xpose.msra.mxu0 %v917
    %940 = vmatprep.subr.bf16.mxu0 0
    %941 = vmatpush1.bf16.xpose.msra.mxu0 %v918
    %942 = vmatprep.subr.bf16.mxu0 0
    %943 = vmatpush1.bf16.xpose.msra.mxu0 %v919
    %944 = vmatprep.subr.bf16.mxu0 0
    %945 = vmatpush1.bf16.xpose.msra.mxu0 %v920
    %946 = vmatprep.subr.bf16.mxu0 0
    %947 = vmatpush1.bf16.xpose.msra.mxu0 %v921
    %948 = vmatprep.subr.bf16.mxu0 0
    %949 = vmatpush1.bf16.xpose.msra.mxu0 %v922
    %950 = vmatprep.subr.bf16.mxu0 0
    %951 = vmatpush1.bf16.xpose.msra.mxu0 %v923
    %952 = vmatprep.subr.bf16.mxu0 0
    %953 = vmatpush1.bf16.xpose.msra.mxu0 %v924
    %954 = vmatprep.subr.bf16.mxu0 0
    %955 = vmatpush1.bf16.xpose.msra.mxu0 %v925
    %956 = vmatprep.subr.bf16.mxu0 0
    %957 = vmatpush1.bf16.xpose.msra.mxu0 %v926
    %958 = vmatprep.subr.bf16.mxu0 0
    %959 = vmatpush1.bf16.xpose.msra.mxu0 %v927
    %960 = vmatprep.subr.bf16.mxu0 0
    %961 = vmatpush1.bf16.xpose.msra.mxu0 %v928
    %962 = vmatprep.mubr.bf16.mxu0 0
    %963 = vmatmul.mubr.bf16.gmra.mrb[0].mxu0 %v929
    %v964 = vpop.f32.mrb[0].mxu0
    %v965 = vadd.f32 0.0, %v964
    %v966 = vpop.f32.mrb[0].mxu0
    %v967 = vadd.f32 0.0, %v966
    %v968 = vpop.f32.mrb[0].mxu0
    %v969 = vpop.f32.mrb[0].mxu0
    %970 = vdwg.mxu0
    %v971 = vsub.f32 12.0, %v965
    %v972 = vsub.f32 12.0, %v967
    %v973 = vand.u32 2147483647, %v971
    %v974 = vand.u32 2147483647, %v972
    %v975 = vsub.f32 0.0, %v973
    %v976 = vsub.f32 0.0, %v974
    %v977 = vmul.f32 %v975, 1.442695
    %v978 = vpow.pop %v977
    %v979 = vmul.f32 %v976, 1.442695
    %v980 = vpow.pop %v979
    %v981 = vadd.f32 %v978, 1.0
    %v982 = vadd.f32 %v980, 1.0
    %v983 = vlog2.pop %v981
    %v984 = vmul.f32 %v983, 0.6931472
    %v985 = vlog2.pop %v982
    %v986 = vmul.f32 %v985, 0.6931472
    %v987 = vmin.f32 %v971, 0.0
    %v988 = vmin.f32 %v972, 0.0
    %v989 = vsub.f32 %v984, %v987
    %v990 = vsub.f32 %v986, %v988
    %v991 = vmax.f32 %v971, 0.0
    %v992 = vmax.f32 %v972, 0.0
    %v993 = vadd.f32 %v984, %v991
    %v994 = vadd.f32 %v986, %v992
    %v995 = vld [vmem:[%s3] ss:$2 sm:$0x3]
    %s996 = scalar_lea.vmem %s3, 1
    %v997 = vld [vmem:[%s996] ss:$2 sm:$0x3]
    %v999 = vlaneseq
    %v1000 = vshrl.u32 %v999, 7
    %v1001 = vsub.s32 0, %v1000
    %v1002 = vrot.slane %v995, %v1001
    %v1003 = vlaneseq
    %v1004 = vshrl.u32 %v1003, 7
    %v1005 = vsub.s32 1, %v1004
    %v1006 = vrot.slane %v995, %v1005
    %v1009 = vmul.f32 %v1002, %v989
    %v1010 = vmul.f32 %v1006, %v990
    %vm1011 = vcmask 1041408
    %v1012 = vsel %vm1011, %v1009, 0.0
    %v1013 = vsel %vm1011, %v1010, 0.0
    %v1014 = vadd.f32 %v1012, %v1013
    %1015 = vadd.xlane.f32.xlu0 %v1014
    %v1016 = vpop.xlane.xlu0 %1015
    %v1018 = vlaneseq
    %v1019 = vshrl.u32 %v1018, 7
    %v1020 = vsub.s32 0, %v1019
    %v1021 = vrot.slane %v997, %v1020
    %v1022 = vlaneseq
    %v1023 = vshrl.u32 %v1022, 7
    %v1024 = vsub.s32 1, %v1023
    %v1025 = vrot.slane %v997, %v1024
    %v1028 = vmul.f32 %v1021, %v993
    %v1029 = vmul.f32 %v1025, %v994
    %v1030 = vsel %vm1011, %v1028, 0.0
    %v1031 = vsel %vm1011, %v1029, 0.0
    %v1032 = vadd.f32 %v1030, %v1031
    %1033 = vadd.xlane.f32.xlu0 %v1032
    %v1034 = vpop.xlane.xlu0 %1033
    %vm1035 = vcmask 1040384
    %v1036 = vsel %vm1035, %v1002, 0.0
    %v1037 = vsel %vm1035, %v1006, 0.0
    %v1038 = vadd.f32 %v1036, %v1037
    %1039 = vadd.xlane.f32.xlu0 %v1038
    %v1040 = vpop.xlane.xlu0 %1039
    %v1041 = vlaneseq
    %v1042 = vand.u32 %v1041, 127
    %vm1043 = vcmp.eq.s32.totalorder %v1042, 0
    %v1044 = vsel %vm1043, %v1040, 0.0
    %vm1045 = vcmp.eq.s32.totalorder %v1042, 1
    %v1046 = vsel %vm1045, %v1016, 0.0
    %v1047 = vadd.f32 %v1044, %v1046
    %vm1048 = vcmp.eq.s32.totalorder %v1042, 2
    %v1049 = vsel %vm1048, %v1034, 0.0
    %v1050 = vadd.f32 %v1047, %v1049
    %vm1051 = vcmp.eq.s32.totalorder %v1042, 3
    %v1052 = vsel %vm1051, %v1016, 0.0
    %v1054 = vrot.slane %v1052, 1
    %v1056 = vadd.f32 %v1050, %v1054
    %vm1057 = vcmp.eq.s32.totalorder %v1042, 4
    %v1058 = vsel %vm1057, %v1034, 0.0
    %v1060 = vrot.slane %v1058, 1
    %v1062 = vadd.f32 %v1056, %v1060
    %p1063 = scmp.eq.s32.totalorder 0, 0
    // Predicated region
    $region26: #{tpu_custom_call.1} parent=1 // pred_check
      %p1064 = pneg %p1063
    $region27: #{tpu_custom_call.1} parent=1 // pred_check_branch
      %1066 = sbr.rel (%p1064) target = $region29
    $region28: #{tpu_custom_call.1} parent=1 // pred_region
      %vm1067 = vcmask 57344
      %1068 = vst.msk [vmem:[#allocation7] sm:$0x1] %vm1067, 0.0
    $region29: #{tpu_custom_call.1} parent=1 // pred_fallthru
      _
    %v1069 = vld [vmem:[#allocation7] sm:$0x1]
    %v1070 = vadd.f32 %v1069, %v1062
    %vm1071 = vcmask 57344
    %1072 = vst.msk [vmem:[#allocation7] sm:$0x1] %vm1071, %v1070
    // Predicated region
    $region30: #{tpu_custom_call.1} parent=1 // pred_check
      _
    $region31: #{tpu_custom_call.1} parent=1 // pred_check_branch
      %1074 = sbr.rel (0) target = $region33
    $region32: #{tpu_custom_call.1} parent=1 // pred_region
      %s1076 = ssub.s32 16, 16
      %1077 = vsyncadd [#allocation4], %s1076
      %s1079 = sshll.u32 [#allocation7], 4
      %s1080 = int_to_ptr.vmem [resolvable:$true] %s1079
      %1082 = dma.vmem_to_hbm [thread:$0]  %s1080, 16, %s4, [#allocation4]
    $region33: #{tpu_custom_call.1} parent=1 // pred_fallthru
      _
    // Predicated region
    $region34: #{tpu_custom_call.1} parent=1 // pred_check
      _
    $region35: #{tpu_custom_call.1} parent=1 // pred_check_branch
      %1084 = sbr.rel (0) target = $region37
    $region36: #{tpu_custom_call.1} parent=1 // pred_region
      %1085 = dma.done [#allocation4], 16
    $region37: #{tpu_custom_call.1} parent=1 // pred_fallthru
      _
    %1086 = vsyncpa [#allocation3], 1
    %1087 = vsyncpa [#allocation6], 1
    %1088 = vsyncpa [#allocation4], 1

</llo_original>
